<compile_context>
chip_gen: v6e
topology: v6e:2x2x1
jax: 0.10.0
libtpu: 0.0.40
codegen_flags: <defaults>
</compile_context>

<pallas_src>
import numpy as np
import jax
import jax.numpy as jnp
from jax.experimental import pallas as pl
from jax.experimental.pallas import tpu as pltpu


# ----------------------------- Pallas kernel -------------------------------- #
def make_cross_edge_kernel(coeff: float):
    """coeff = -0.5 / (offset[1]-offset[0])**2 (GaussianSmearing coefficient)."""

    def kernel(dist_ref, offs_ref, w1t_ref, b1_ref, w2t_ref, b2_ref, out_ref):
        dist = dist_ref[...]                       # [5, TE]  edge distances (transposed)
        offs = offs_ref[...]                       # [D, 1]   RBF centers

        # Gaussian smearing, built transposed: each group is a [D, TE] slab.
        # Concatenation along sublanes at 8-row boundaries is tile-aligned.
        parts = []
        for g in range(5):                         # static unroll
            diff = dist[g:g + 1, :] - offs         # [1,TE] - [D,1] -> [D, TE]
            parts.append(jnp.exp(coeff * diff * diff))
        rbf_t = jnp.concatenate(parts, axis=0)     # [5*D, TE]

        # cross_attr_embedder, transposed: h^T = relu(W1^T @ rbf^T + b1)
        h_t = jnp.dot(w1t_ref[...], rbf_t, preferred_element_type=jnp.float32)
        h_t = jnp.maximum(h_t + b1_ref[...], 0.0)  # [F, TE]
        o_t = jnp.dot(w2t_ref[...], h_t, preferred_element_type=jnp.float32)
        out_ref[...] = (o_t + b2_ref[...]).astype(out_ref.dtype)

    return kernel


def cross_edge_embed(edge_vecs, offsets, coeff, w1, b1, w2, b2, tile_e=2048):
    """edge_vecs: [E, 15] -> edge_attr [E, fold_dim] f32 (Pallas)."""
    E = edge_vecs.shape[0]
    D = offsets.shape[0]
    F = w2.shape[1]

    if E == 0:  # early-out: radius graph returned no edges
        return jnp.zeros((0, F), jnp.float32)

    # Shrink the tile for tiny inputs; otherwise use big tiles (>=1K edges) so
    # per-grid-step pipeline overhead is negligible.  Lanes stay 128-aligned.
    tile_e = int(min(tile_e, max(128, ((E + 127) // 128) * 128)))
    E_pad = ((E + tile_e - 1) // tile_e) * tile_e
    n_tiles = E_pad // tile_e

    # Per-group distances, computed in the wrapper (no in-kernel lane reduce),
    # transposed so edges land on the lane axis; single jnp.pad (no zeros+scatter).
    v = edge_vecs.astype(jnp.float32).reshape(E, 5, 3)
    dist_t = jnp.sqrt(jnp.sum(v * v, axis=-1)).T              # [5, E]
    dist_t = jnp.pad(dist_t, ((0, 0), (0, E_pad - E)))        # [5, E_pad]

    offs_c = offsets.reshape(D, 1).astype(jnp.float32)
    w1t = w1.astype(jnp.float32).T                            # [F, 5*D]
    w2t = w2.astype(jnp.float32).T                            # [F, F]
    b1c = b1.reshape(F, 1).astype(jnp.float32)
    b2c = b2.reshape(F, 1).astype(jnp.float32)

    kernel = make_cross_edge_kernel(float(coeff))

    out_t = pl.pallas_call(
        kernel,
        out_shape=jax.ShapeDtypeStruct((F, E_pad), jnp.float32),
        grid_spec=pltpu.PrefetchScalarGridSpec(
            num_scalar_prefetch=0,
            grid=(n_tiles,),
            in_specs=[
                pl.BlockSpec((5, tile_e), lambda i: (0, i)),   # distances (tiled over edges)
                pl.BlockSpec((D, 1), lambda i: (0, 0)),        # RBF offsets
                pl.BlockSpec((F, 5 * D), lambda i: (0, 0)),    # W1^T
                pl.BlockSpec((F, 1), lambda i: (0, 0)),        # b1
                pl.BlockSpec((F, F), lambda i: (0, 0)),        # W2^T
                pl.BlockSpec((F, 1), lambda i: (0, 0)),        # b2
            ],
            out_specs=pl.BlockSpec((F, tile_e), lambda i: (0, i)),   # lane-dense output
        ),
        compiler_params=pltpu.CompilerParams(dimension_semantics=("parallel",)),
    )(dist_t, offs_c, w1t, b1c, w2t, b2c)

    # Back to the module's [E, fold_dim] convention.
    return out_t[:, :E].T


# -------------------------- host glue (graph build) -------------------------- #
def build_radius_cross_edges(protein_pos, ligand_pos, protein_batch, ligand_batch, radius):
    """Mimics torch_cluster.radius(protein/r, ligand/r, 1.0, ...):
    returns [2, E] with row 0 = ligand (src) indices, row 1 = protein (dst) indices.
    Data-dependent output size -> done on host."""
    pp = np.asarray(protein_pos)
    lp = np.asarray(ligand_pos)
    d = np.linalg.norm(lp[:, None, :] - pp[None, :, :], axis=-1)        # [L, P]
    same_batch = np.asarray(ligand_batch)[:, None] == np.asarray(protein_batch)[None, :]
    mask = (d <= radius) & same_batch
    lig_idx, prot_idx = np.nonzero(mask)
    return np.stack([lig_idx, prot_idx], axis=0).astype(np.int64)


def cross_edge_builder_forward(data, params, cross_radius):
    # TODO(synk): torch_cluster.radius neighbor search (data-dependent edge count)
    # has no clean Pallas equivalent; it is computed as host glue above.
    cross_idx = build_radius_cross_edges(
        data["protein_pos"], data["ligand_pos"],
        data["protein_batch"], data["ligand_batch"], cross_radius)
    src, dst = cross_idx[0], cross_idx[1]

    lig = data["ligand_pos"][src]                                        # [E, 3]
    vecs = [lig - data[k][dst] for k in
            ("protein_pos", "protein_pos_Cb", "protein_pos_C",
             "protein_pos_O", "protein_pos_N")]
    edge_vecs = jnp.concatenate(vecs, axis=-1)                           # [E, 15]

    edge_attr = cross_edge_embed(
        edge_vecs, params["offsets"], params["coeff"],
        params["w1"], params["b1"], params["w2"], params["b2"])
    return cross_idx, edge_attr


# ------------------------------ pure-JAX reference --------------------------- #
def reference_embed(edge_vecs, offsets, coeff, w1, b1, w2, b2):
    parts = []
    for g in range(5):
        v = edge_vecs[:, 3 * g: 3 * g + 3]
        d = jnp.sqrt(jnp.sum(v * v, axis=-1, keepdims=True))
        parts.append(jnp.exp(coeff * (d - offsets[None, :]) ** 2))
    rbf = jnp.concatenate(parts, axis=-1)
    h = jnp.maximum(rbf @ w1 + b1[None, :], 0.0)
    return h @ w2 + b2[None, :]


# ------------------------------------ main ----------------------------------- #
if __name__ == "__main__":
    # args (small, consistent with the module)
    n_protein, n_ligand = 16, 8
    radius_emb_dim, fold_dim = 8, 32
    protein_radius, cross_radius = 4.0, 10.0

    key = jax.random.PRNGKey(0)
    ks = jax.random.split(key, 10)

    data = {
        "protein_pos":    2.0 * jax.random.normal(ks[0], (n_protein, 3), jnp.float32),
        "protein_pos_Cb": 2.0 * jax.random.normal(ks[1], (n_protein, 3), jnp.float32),
        "protein_pos_C":  2.0 * jax.random.normal(ks[2], (n_protein, 3), jnp.float32),
        "protein_pos_O":  2.0 * jax.random.normal(ks[3], (n_protein, 3), jnp.float32),
        "protein_pos_N":  2.0 * jax.random.normal(ks[4], (n_protein, 3), jnp.float32),
        "ligand_pos":     2.0 * jax.random.normal(ks[5], (n_ligand, 3), jnp.float32),
        "protein_batch":  np.repeat(np.arange(2), n_protein // 2),
        "ligand_batch":   np.repeat(np.arange(2), n_ligand // 2),
    }

    # GaussianSmearing(0.0, protein_radius, radius_emb_dim)
    offsets = jnp.linspace(0.0, protein_radius, radius_emb_dim)
    coeff = -0.5 / float(offsets[1] - offsets[0]) ** 2

    # cross_attr_embedder params: Linear(5*D, fold_dim) -> ReLU -> Linear(fold_dim, fold_dim)
    d_in = 5 * radius_emb_dim
    w1 = jax.random.normal(ks[6], (d_in, fold_dim), jnp.float32) * (2.0 / d_in) ** 0.5
    b1 = jnp.zeros((fold_dim,), jnp.float32)
    w2 = jax.random.normal(ks[7], (fold_dim, fold_dim), jnp.float32) * (1.0 / fold_dim) ** 0.5
    b2 = jnp.zeros((fold_dim,), jnp.float32)

    params = {"offsets": offsets, "coeff": coeff, "w1": w1, "b1": b1, "w2": w2, "b2": b2}

    cross_idx, edge_attr = cross_edge_builder_forward(data, params, cross_radius)
    edge_attr = jax.block_until_ready(edge_attr)

    # Verify against pure-JAX reference of the same forward.
    src, dst = cross_idx[0], cross_idx[1]
    lig = data["ligand_pos"][src]
    edge_vecs_ref = jnp.concatenate(
        [lig - data[k][dst] for k in
         ("protein_pos", "protein_pos_Cb", "protein_pos_C", "protein_pos_O", "protein_pos_N")],
        axis=-1)
    ref = reference_embed(edge_vecs_ref, offsets, coeff, w1, b1, w2, b2)

    assert edge_attr.shape == (cross_idx.shape[1], fold_dim)
    np.testing.assert_allclose(np.asarray(edge_attr), np.asarray(ref), rtol=1e-4, atol=1e-4)

    print("KERNEL_OK")
</pallas_src>

<mosaic_0001>
module attributes {stable_mosaic.version = 11 : i64} {
  func.func @kernel(%arg0: i32, %arg1: memref<5x128xf32, #tpu.memory_space<vmem>>, %arg2: memref<8x1xf32, #tpu.memory_space<vmem>>, %arg3: memref<32x40xf32, #tpu.memory_space<vmem>>, %arg4: memref<32x1xf32, #tpu.memory_space<vmem>>, %arg5: memref<32x32xf32, #tpu.memory_space<vmem>>, %arg6: memref<32x1xf32, #tpu.memory_space<vmem>>, %arg7: memref<32x128xf32, #tpu.memory_space<vmem>>) attributes {dimension_semantics = [#tpu.dimension_semantics<parallel>], iteration_bounds = array<i64: 1>, scalar_prefetch = 0 : i64, scratch_operands = 0 : i64, tpu.core_type = #tpu.core_type<tc>, window_params = [{transform_indices = @transform_0, window_bounds = array<i64: 5, 128>}, {pipeline_mode = #tpu.pipeline_mode<synchronous>, transform_indices = @transform_1, window_bounds = array<i64: 8, 1>}, {pipeline_mode = #tpu.pipeline_mode<synchronous>, transform_indices = @transform_2, window_bounds = array<i64: 32, 40>}, {pipeline_mode = #tpu.pipeline_mode<synchronous>, transform_indices = @transform_3, window_bounds = array<i64: 32, 1>}, {pipeline_mode = #tpu.pipeline_mode<synchronous>, transform_indices = @transform_4, window_bounds = array<i64: 32, 32>}, {pipeline_mode = #tpu.pipeline_mode<synchronous>, transform_indices = @transform_5, window_bounds = array<i64: 32, 1>}, {transform_indices = @transform_6, window_bounds = array<i64: 32, 128>}]} {
    %c0 = arith.constant 0 : index
    %c0_0 = arith.constant 0 : index
    %0 = vector.load %arg1[%c0, %c0_0] : memref<5x128xf32, #tpu.memory_space<vmem>>, vector<5x128xf32>
    %c0_1 = arith.constant 0 : index
    %c0_2 = arith.constant 0 : index
    %1 = vector.load %arg2[%c0_1, %c0_2] : memref<8x1xf32, #tpu.memory_space<vmem>>, vector<8x1xf32>
    %2 = vector.extract_strided_slice %0 {offsets = [0, 0], sizes = [1, 128], strides = [1, 1]} : vector<5x128xf32> to vector<1x128xf32>
    %3 = vector.broadcast %2 : vector<1x128xf32> to vector<8x128xf32>
    %4 = vector.broadcast %1 : vector<8x1xf32> to vector<8x128xf32>
    %5 = arith.subf %3, %4 : vector<8x128xf32>
    %cst = arith.constant -1.53124988 : f32
    %6 = vector.broadcast %cst : f32 to vector<8x128xf32>
    %7 = arith.mulf %6, %5 : vector<8x128xf32>
    %8 = arith.mulf %7, %5 : vector<8x128xf32>
    %9 = math.exp %8 : vector<8x128xf32>
    %10 = vector.extract_strided_slice %0 {offsets = [1, 0], sizes = [1, 128], strides = [1, 1]} : vector<5x128xf32> to vector<1x128xf32>
    %11 = vector.broadcast %10 : vector<1x128xf32> to vector<8x128xf32>
    %12 = vector.broadcast %1 : vector<8x1xf32> to vector<8x128xf32>
    %13 = arith.subf %11, %12 : vector<8x128xf32>
    %cst_3 = arith.constant -1.53124988 : f32
    %14 = vector.broadcast %cst_3 : f32 to vector<8x128xf32>
    %15 = arith.mulf %14, %13 : vector<8x128xf32>
    %16 = arith.mulf %15, %13 : vector<8x128xf32>
    %17 = math.exp %16 : vector<8x128xf32>
    %18 = vector.extract_strided_slice %0 {offsets = [2, 0], sizes = [1, 128], strides = [1, 1]} : vector<5x128xf32> to vector<1x128xf32>
    %19 = vector.broadcast %18 : vector<1x128xf32> to vector<8x128xf32>
    %20 = vector.broadcast %1 : vector<8x1xf32> to vector<8x128xf32>
    %21 = arith.subf %19, %20 : vector<8x128xf32>
    %cst_4 = arith.constant -1.53124988 : f32
    %22 = vector.broadcast %cst_4 : f32 to vector<8x128xf32>
    %23 = arith.mulf %22, %21 : vector<8x128xf32>
    %24 = arith.mulf %23, %21 : vector<8x128xf32>
    %25 = math.exp %24 : vector<8x128xf32>
    %26 = vector.extract_strided_slice %0 {offsets = [3, 0], sizes = [1, 128], strides = [1, 1]} : vector<5x128xf32> to vector<1x128xf32>
    %27 = vector.broadcast %26 : vector<1x128xf32> to vector<8x128xf32>
    %28 = vector.broadcast %1 : vector<8x1xf32> to vector<8x128xf32>
    %29 = arith.subf %27, %28 : vector<8x128xf32>
    %cst_5 = arith.constant -1.53124988 : f32
    %30 = vector.broadcast %cst_5 : f32 to vector<8x128xf32>
    %31 = arith.mulf %30, %29 : vector<8x128xf32>
    %32 = arith.mulf %31, %29 : vector<8x128xf32>
    %33 = math.exp %32 : vector<8x128xf32>
    %34 = vector.extract_strided_slice %0 {offsets = [4, 0], sizes = [1, 128], strides = [1, 1]} : vector<5x128xf32> to vector<1x128xf32>
    %35 = vector.broadcast %34 : vector<1x128xf32> to vector<8x128xf32>
    %36 = vector.broadcast %1 : vector<8x1xf32> to vector<8x128xf32>
    %37 = arith.subf %35, %36 : vector<8x128xf32>
    %cst_6 = arith.constant -1.53124988 : f32
    %38 = vector.broadcast %cst_6 : f32 to vector<8x128xf32>
    %39 = arith.mulf %38, %37 : vector<8x128xf32>
    %40 = arith.mulf %39, %37 : vector<8x128xf32>
    %41 = math.exp %40 : vector<8x128xf32>
    %42 = tpu.concatenate %9, %17, %25, %33, %41 in 0 : vector<8x128xf32>, vector<8x128xf32>, vector<8x128xf32>, vector<8x128xf32>, vector<8x128xf32> -> vector<40x128xf32>
    %c0_7 = arith.constant 0 : index
    %c0_8 = arith.constant 0 : index
    %43 = vector.load %arg3[%c0_7, %c0_8] : memref<32x40xf32, #tpu.memory_space<vmem>>, vector<32x40xf32>
    %cst_9 = arith.constant dense<0.000000e+00> : vector<32x128xf32>
    %44 = tpu.matmul %43, %42, %cst_9 {dimension_numbers = #tpu.dot_dimension_numbers<[1], [0], [0], [1], [0, 0, 1, 1], [], []>} : vector<32x40xf32>, vector<40x128xf32>, vector<32x128xf32> -> vector<32x128xf32>
    %c0_10 = arith.constant 0 : index
    %c0_11 = arith.constant 0 : index
    %45 = vector.load %arg4[%c0_10, %c0_11] : memref<32x1xf32, #tpu.memory_space<vmem>>, vector<32x1xf32>
    %46 = vector.broadcast %45 : vector<32x1xf32> to vector<32x128xf32>
    %47 = arith.addf %44, %46 : vector<32x128xf32>
    %cst_12 = arith.constant 0.000000e+00 : f32
    %48 = vector.broadcast %cst_12 : f32 to vector<32x128xf32>
    %49 = arith.maximumf %47, %48 : vector<32x128xf32>
    %c0_13 = arith.constant 0 : index
    %c0_14 = arith.constant 0 : index
    %50 = vector.load %arg5[%c0_13, %c0_14] : memref<32x32xf32, #tpu.memory_space<vmem>>, vector<32x32xf32>
    %cst_15 = arith.constant dense<0.000000e+00> : vector<32x128xf32>
    %51 = tpu.matmul %50, %49, %cst_15 {dimension_numbers = #tpu.dot_dimension_numbers<[1], [0], [0], [1], [0, 0, 1, 1], [], []>} : vector<32x32xf32>, vector<32x128xf32>, vector<32x128xf32> -> vector<32x128xf32>
    %c0_16 = arith.constant 0 : index
    %c0_17 = arith.constant 0 : index
    %52 = vector.load %arg6[%c0_16, %c0_17] : memref<32x1xf32, #tpu.memory_space<vmem>>, vector<32x1xf32>
    %53 = vector.broadcast %52 : vector<32x1xf32> to vector<32x128xf32>
    %54 = arith.addf %51, %53 : vector<32x128xf32>
    %c0_18 = arith.constant 0 : index
    %c0_19 = arith.constant 0 : index
    %55 = vector.load %arg7[%c0_18, %c0_19] : memref<32x128xf32, #tpu.memory_space<vmem>>, vector<32x128xf32>
    tpu.vector_store %arg7[%c0_18, %c0_19], %54 {strides = array<i32>} : memref<32x128xf32, #tpu.memory_space<vmem>>, vector<32x128xf32>,
    return
  }
  func.func @transform_0(%arg0: i32) -> (i32, i32) {
    %c0_i32 = arith.constant 0 : i32
    %c0_i32_0 = arith.constant 0 : i32
    return %c0_i32, %arg0 : i32, i32
  }
  func.func @transform_1(%arg0: i32) -> (i32, i32) {
    %c0_i32 = arith.constant 0 : i32
    %c0_i32_0 = arith.constant 0 : i32
    %c0_i32_1 = arith.constant 0 : i32
    return %c0_i32, %c0_i32_0 : i32, i32
  }
  func.func @transform_2(%arg0: i32) -> (i32, i32) {
    %c0_i32 = arith.constant 0 : i32
    %c0_i32_0 = arith.constant 0 : i32
    %c0_i32_1 = arith.constant 0 : i32
    return %c0_i32, %c0_i32_0 : i32, i32
  }
  func.func @transform_3(%arg0: i32) -> (i32, i32) {
    %c0_i32 = arith.constant 0 : i32
    %c0_i32_0 = arith.constant 0 : i32
    %c0_i32_1 = arith.constant 0 : i32
    return %c0_i32, %c0_i32_0 : i32, i32
  }
  func.func @transform_4(%arg0: i32) -> (i32, i32) {
    %c0_i32 = arith.constant 0 : i32
    %c0_i32_0 = arith.constant 0 : i32
    %c0_i32_1 = arith.constant 0 : i32
    return %c0_i32, %c0_i32_0 : i32, i32
  }
  func.func @transform_5(%arg0: i32) -> (i32, i32) {
    %c0_i32 = arith.constant 0 : i32
    %c0_i32_0 = arith.constant 0 : i32
    %c0_i32_1 = arith.constant 0 : i32
    return %c0_i32, %c0_i32_0 : i32, i32
  }
  func.func @transform_6(%arg0: i32) -> (i32, i32) {
    %c0_i32 = arith.constant 0 : i32
    %c0_i32_0 = arith.constant 0 : i32
    return %c0_i32, %arg0 : i32, i32
  }
}

</mosaic_0001>

<llo_original>
// kernel: tpu_custom_call.1
$region0: #{tpu_custom_call.1}
  #allocation0 [shape = 'u32[]', space=smem, size = 0x4, offset = 0x4, fixed_abs, tag = 'smem constant byte address 0x4 - core index']
  #allocation1 [shape = 'u32[144,128]{1,0:T(1,128)}', space=vmem, size = 0x12000, scoped, tag = 'internal scratch']
  %s0 = inlined_call_operand.vmem [shape: f32[5,128], index: 0, kind: input, shape index: {}]
  %s1 = inlined_call_operand.vmem [shape: f32[8,1], index: 1, kind: input, shape index: {}]
  %s2 = inlined_call_operand.vmem [shape: f32[32,40], index: 2, kind: input, shape index: {}]
  %s3 = inlined_call_operand.vmem [shape: f32[32,1], index: 3, kind: input, shape index: {}]
  %s4 = inlined_call_operand.vmem [shape: f32[32,32], index: 4, kind: input, shape index: {}]
  %s5 = inlined_call_operand.vmem [shape: f32[32,1], index: 5, kind: input, shape index: {}]
  %s6 = inlined_call_operand.hbm [shape: f32[32,128], index: 6, kind: output, shape index: {}]
  %s7 = sld [smem:[#allocation0]]
  $region34: #{tpu_custom_call.1} parent=0
    _
  %s9 = ssub.s32 1, %s7
  %s10 = scalar_select 0, %s9, %s7
  $region1: #{tpu_custom_call.1} parent=0
    #allocation2 [shape = 'u8[16384]{0}', space=vmem, size = 0x4000, scoped, tag = 'output window, operand 0, single buffered']
    #allocation3 [shape = 's32[1]{0}', space=sflag, size = 0x4, scoped, tag = 'scoped memory for tpu_custom_call.1']
    %11 = vsyncpa [#allocation3], 0
    // Predicated region
    $region2: #{tpu_custom_call.1} parent=1 // pred_check
      _
    $region3: #{tpu_custom_call.1} parent=1 // pred_check_branch
      %13 = sbr.rel (0) target = $region5
    $region4: #{tpu_custom_call.1} parent=1 // pred_region
      _
    $region5: #{tpu_custom_call.1} parent=1 // pred_fallthru
      _
    // Predicated region
    $region6: #{tpu_custom_call.1} parent=1 // pred_check
      _
    $region7: #{tpu_custom_call.1} parent=1 // pred_check_branch
      %15 = sbr.rel (0) target = $region9
    $region8: #{tpu_custom_call.1} parent=1 // pred_region
      _
    $region9: #{tpu_custom_call.1} parent=1 // pred_fallthru
      _
    // Predicated region
    $region10: #{tpu_custom_call.1} parent=1 // pred_check
      _
    $region11: #{tpu_custom_call.1} parent=1 // pred_check_branch
      %17 = sbr.rel (0) target = $region13
    $region12: #{tpu_custom_call.1} parent=1 // pred_region
      _
    $region13: #{tpu_custom_call.1} parent=1 // pred_fallthru
      _
    // Predicated region
    $region14: #{tpu_custom_call.1} parent=1 // pred_check
      _
    $region15: #{tpu_custom_call.1} parent=1 // pred_check_branch
      %19 = sbr.rel (0) target = $region17
    $region16: #{tpu_custom_call.1} parent=1 // pred_region
      _
    $region17: #{tpu_custom_call.1} parent=1 // pred_fallthru
      _
    // Predicated region
    $region18: #{tpu_custom_call.1} parent=1 // pred_check
      _
    $region19: #{tpu_custom_call.1} parent=1 // pred_check_branch
      %21 = sbr.rel (0) target = $region21
    $region20: #{tpu_custom_call.1} parent=1 // pred_region
      _
    $region21: #{tpu_custom_call.1} parent=1 // pred_fallthru
      _
    // Predicated region
    $region22: #{tpu_custom_call.1} parent=1 // pred_check
      _
    $region23: #{tpu_custom_call.1} parent=1 // pred_check_branch
      %23 = sbr.rel (0) target = $region25
    $region24: #{tpu_custom_call.1} parent=1 // pred_region
      _
    $region25: #{tpu_custom_call.1} parent=1 // pred_fallthru
      _
    %v24 = vld [vmem:[%s0] sm:$0x1f]
    %v25 = vld [vmem:[%s1] sm:$0xff]
    %v26 = vlaneseq
    %v27 = vshrl.u32 %v26, 7
    %v28 = vsub.s32 0, %v27
    %v29 = vrot.slane %v24, %v28
    %31 = vset.pattern.permute.xlu0 0
    %32 = vperm.xlu0 %31, %v25
    %v33 = vpop.permute.xlu0 %32
    %v35 = vsub.f32 %v29, %v33
    %v36 = vmul.f32 %v35, -1.5312499
    %v37 = vmul.f32 %v36, %v35
    %v38 = vmul.f32 %v37, 1.442695
    %v39 = vpow.pop %v38
    %v40 = vlaneseq
    %v41 = vshrl.u32 %v40, 7
    %v42 = vsub.s32 1, %v41
    %v43 = vrot.slane %v24, %v42
    %v44 = vsub.f32 %v43, %v33
    %v45 = vmul.f32 %v44, -1.5312499
    %v46 = vmul.f32 %v45, %v44
    %v47 = vmul.f32 %v46, 1.442695
    %v48 = vpow.pop %v47
    %v49 = vlaneseq
    %v50 = vshrl.u32 %v49, 7
    %v51 = vsub.s32 2, %v50
    %v52 = vrot.slane %v24, %v51
    %v53 = vsub.f32 %v52, %v33
    %v54 = vmul.f32 %v53, -1.5312499
    %v55 = vmul.f32 %v54, %v53
    %v56 = vmul.f32 %v55, 1.442695
    %v57 = vpow.pop %v56
    %v58 = vlaneseq
    %v59 = vshrl.u32 %v58, 7
    %v60 = vsub.s32 3, %v59
    %v61 = vrot.slane %v24, %v60
    %v62 = vsub.f32 %v61, %v33
    %v63 = vmul.f32 %v62, -1.5312499
    %v64 = vmul.f32 %v63, %v62
    %v65 = vmul.f32 %v64, 1.442695
    %v66 = vpow.pop %v65
    %v67 = vlaneseq
    %v68 = vshrl.u32 %v67, 7
    %v69 = vsub.s32 4, %v68
    %v70 = vrot.slane %v24, %v69
    %v71 = vsub.f32 %v70, %v33
    %v72 = vmul.f32 %v71, -1.5312499
    %v73 = vmul.f32 %v72, %v71
    %v74 = vmul.f32 %v73, 1.442695
    %v75 = vpow.pop %v74
    %v76 = vld [vmem:[%s2] sm:$0xff]
    %v77 = vld [vmem:[%s2 + $0x8] sm:$0xff]
    %v78 = vld [vmem:[%s2 + $0x10] sm:$0xff]
    %v79 = vld [vmem:[%s2 + $0x18] sm:$0xff]
    %v80 = vld [vmem:[%s3] sm:$0xff]
    %v81 = vld [vmem:[%s3 + $0x8] sm:$0xff]
    %v82 = vld [vmem:[%s3 + $0x10] sm:$0xff]
    %v83 = vld [vmem:[%s3 + $0x18] sm:$0xff]
    %85 = vset.pattern.permute.xlu0 0
    %86 = vperm.xlu0 %85, %v80
    %v87 = vpop.permute.xlu0 %86
    %90 = vset.pattern.permute.xlu0 0
    %91 = vperm.xlu0 %90, %v81
    %v92 = vpop.permute.xlu0 %91
    %95 = vset.pattern.permute.xlu0 0
    %96 = vperm.xlu0 %95, %v82
    %v97 = vpop.permute.xlu0 %96
    %100 = vset.pattern.permute.xlu0 0
    %101 = vperm.xlu0 %100, %v83
    %v102 = vpop.permute.xlu0 %101
    %vm104 = vcmask 326656
    %v106 = vsel %vm104, %v76, 0
    %v109 = vsel %vm104, %v77, 0
    %v112 = vsel %vm104, %v78, 0
    %v115 = vsel %vm104, %v79, 0
    %117 = vmatprep.subr.mxu0 0.0
    %118 = vmatpush1.msra.mxu0 0.0
    %119 = vmatprep.subr.mxu0 0.0
    %120 = vmatpush1.msra.mxu0 0.0
    %121 = vmatprep.subr.mxu0 0.0
    %122 = vmatpush1.msra.mxu0 0.0
    %123 = vmatprep.subr.mxu0 0.0
    %124 = vmatpush1.msra.mxu0 0.0
    %125 = vmatprep.subr.mxu0 0.0
    %126 = vmatpush1.msra.mxu0 0.0
    %127 = vmatprep.subr.mxu0 0.0
    %128 = vmatpush1.msra.mxu0 0.0
    %129 = vmatprep.subr.mxu0 0.0
    %130 = vmatpush1.msra.mxu0 0.0
    %131 = vmatprep.subr.mxu0 0.0
    %132 = vmatpush1.msra.mxu0 0.0
    %133 = vmatprep.subr.mxu0 0.0
    %134 = vmatpush1.msra.mxu0 0.0
    %135 = vmatprep.subr.mxu0 0.0
    %136 = vmatpush1.msra.mxu0 0.0
    %137 = vmatprep.subr.mxu0 0.0
    %138 = vmatpush1.msra.mxu0 0.0
    %139 = vmatprep.subr.mxu0 0.0
    %140 = vmatpush1.msra.mxu0 %v75
    %141 = vmatprep.subr.mxu0 0.0
    %142 = vmatpush1.msra.mxu0 %v66
    %143 = vmatprep.subr.mxu0 0.0
    %144 = vmatpush1.msra.mxu0 %v57
    %145 = vmatprep.subr.mxu0 0.0
    %146 = vmatpush1.msra.mxu0 %v48
    %147 = vmatprep.subr.mxu0 0.0
    %148 = vmatpush1.msra.mxu0 %v39
    %149 = vmatprep.subr.mxu0 0.0
    %150 = vmatpush2.msra.mxu0 0.0
    %151 = vmatprep.subr.mxu0 0.0
    %152 = vmatpush2.msra.mxu0 0.0
    %153 = vmatprep.subr.mxu0 0.0
    %154 = vmatpush2.msra.mxu0 0.0
    %155 = vmatprep.subr.mxu0 0.0
    %156 = vmatpush2.msra.mxu0 0.0
    %157 = vmatprep.subr.mxu0 0.0
    %158 = vmatpush2.msra.mxu0 0.0
    %159 = vmatprep.subr.mxu0 0.0
    %160 = vmatpush2.msra.mxu0 0.0
    %161 = vmatprep.subr.mxu0 0.0
    %162 = vmatpush2.msra.mxu0 0.0
    %163 = vmatprep.subr.mxu0 0.0
    %164 = vmatpush2.msra.mxu0 0.0
    %165 = vmatprep.subr.mxu0 0.0
    %166 = vmatpush2.msra.mxu0 0.0
    %167 = vmatprep.subr.mxu0 0.0
    %168 = vmatpush2.msra.mxu0 0.0
    %169 = vmatprep.subr.mxu0 0.0
    %170 = vmatpush2.msra.mxu0 0.0
    %171 = vmatprep.subr.mxu0 0.0
    %172 = vmatpush2.msra.mxu0 0.0
    %173 = vmatprep.subr.mxu0 0.0
    %174 = vmatpush2.msra.mxu0 0.0
    %175 = vmatprep.subr.mxu0 0.0
    %176 = vmatpush2.msra.mxu0 0.0
    %177 = vmatprep.subr.mxu0 0.0
    %178 = vmatpush2.msra.mxu0 0.0
    %179 = vmatprep.subr.mxu0 0.0
    %180 = vmatpush2.msra.mxu0 0.0
    %181 = vmatprep.mubr.f32.mxu0 0.0
    %182 = vmatmul.mubr.f32.gmra.mxu0 %v106
    %v183 = vpop.f32.mrf.mxu0
    %v184 = vadd.f32 %v87, %v183
    %v185 = vpop.f32.mrf.mxu0
    %186 = vmatprep.mubr.f32.mxu0 0.0
    %187 = vmatmul.mubr.f32.gmra.mxu0 %v109
    %v188 = vpop.f32.mrf.mxu0
    %v189 = vadd.f32 %v92, %v188
    %v190 = vpop.f32.mrf.mxu0
    %191 = vmatprep.mubr.f32.mxu0 0.0
    %192 = vmatmul.mubr.f32.gmra.mxu0 %v112
    %v193 = vpop.f32.mrf.mxu0
    %v194 = vadd.f32 %v97, %v193
    %v195 = vpop.f32.mrf.mxu0
    %196 = vmatprep.mubr.f32.mxu0 0.0
    %197 = vmatmul.mubr.f32.gmra.mxu0 %v115
    %v198 = vpop.f32.mrf.mxu0
    %v199 = vadd.f32 %v102, %v198
    %v200 = vpop.f32.mrf.mxu0
    %201 = vdwg.mxu0
    %v202 = vmax.f32 %v184, 0.0
    %v203 = vmax.f32 %v189, 0.0
    %v204 = vmax.f32 %v194, 0.0
    %v205 = vmax.f32 %v199, 0.0
    %v206 = vld [vmem:[%s4] sm:$0xff]
    %v207 = vld [vmem:[%s4 + $0x8] sm:$0xff]
    %v208 = vld [vmem:[%s4 + $0x10] sm:$0xff]
    %v209 = vld [vmem:[%s4 + $0x18] sm:$0xff]
    %v210 = vld [vmem:[%s5] sm:$0xff]
    %v211 = vld [vmem:[%s5 + $0x8] sm:$0xff]
    %v212 = vld [vmem:[%s5 + $0x10] sm:$0xff]
    %v213 = vld [vmem:[%s5 + $0x18] sm:$0xff]
    %215 = vset.pattern.permute.xlu0 0
    %216 = vperm.xlu0 %215, %v210
    %v217 = vpop.permute.xlu0 %216
    %220 = vset.pattern.permute.xlu0 0
    %221 = vperm.xlu0 %220, %v211
    %v222 = vpop.permute.xlu0 %221
    %225 = vset.pattern.permute.xlu0 0
    %226 = vperm.xlu0 %225, %v212
    %v227 = vpop.permute.xlu0 %226
    %230 = vset.pattern.permute.xlu0 0
    %231 = vperm.xlu0 %230, %v213
    %v232 = vpop.permute.xlu0 %231
    %vm234 = vcmask 261120
    %v236 = vsel %vm234, %v206, 0
    %v239 = vsel %vm234, %v207, 0
    %v242 = vsel %vm234, %v208, 0
    %v245 = vsel %vm234, %v209, 0
    %247 = vmatprep.subr.mxu0 0.0
    %248 = vmatpush1.msra.mxu0 0.0
    %249 = vmatprep.subr.mxu0 0.0
    %250 = vmatpush1.msra.mxu0 0.0
    %251 = vmatprep.subr.mxu0 0.0
    %252 = vmatpush1.msra.mxu0 0.0
    %253 = vmatprep.subr.mxu0 0.0
    %254 = vmatpush1.msra.mxu0 0.0
    %255 = vmatprep.subr.mxu0 0.0
    %256 = vmatpush1.msra.mxu0 0.0
    %257 = vmatprep.subr.mxu0 0.0
    %258 = vmatpush1.msra.mxu0 0.0
    %259 = vmatprep.subr.mxu0 0.0
    %260 = vmatpush1.msra.mxu0 0.0
    %261 = vmatprep.subr.mxu0 0.0
    %262 = vmatpush1.msra.mxu0 0.0
    %263 = vmatprep.subr.mxu0 0.0
    %264 = vmatpush1.msra.mxu0 0.0
    %265 = vmatprep.subr.mxu0 0.0
    %266 = vmatpush1.msra.mxu0 0.0
    %267 = vmatprep.subr.mxu0 0.0
    %268 = vmatpush1.msra.mxu0 0.0
    %269 = vmatprep.subr.mxu0 0.0
    %270 = vmatpush1.msra.mxu0 0.0
    %271 = vmatprep.subr.mxu0 0.0
    %272 = vmatpush1.msra.mxu0 %v205
    %273 = vmatprep.subr.mxu0 0.0
    %274 = vmatpush1.msra.mxu0 %v204
    %275 = vmatprep.subr.mxu0 0.0
    %276 = vmatpush1.msra.mxu0 %v203
    %277 = vmatprep.subr.mxu0 0.0
    %278 = vmatpush1.msra.mxu0 %v202
    %279 = vmatprep.subr.mxu0 0.0
    %280 = vmatpush2.msra.mxu0 0.0
    %281 = vmatprep.subr.mxu0 0.0
    %282 = vmatpush2.msra.mxu0 0.0
    %283 = vmatprep.subr.mxu0 0.0
    %284 = vmatpush2.msra.mxu0 0.0
    %285 = vmatprep.subr.mxu0 0.0
    %286 = vmatpush2.msra.mxu0 0.0
    %287 = vmatprep.subr.mxu0 0.0
    %288 = vmatpush2.msra.mxu0 0.0
    %289 = vmatprep.subr.mxu0 0.0
    %290 = vmatpush2.msra.mxu0 0.0
    %291 = vmatprep.subr.mxu0 0.0
    %292 = vmatpush2.msra.mxu0 0.0
    %293 = vmatprep.subr.mxu0 0.0
    %294 = vmatpush2.msra.mxu0 0.0
    %295 = vmatprep.subr.mxu0 0.0
    %296 = vmatpush2.msra.mxu0 0.0
    %297 = vmatprep.subr.mxu0 0.0
    %298 = vmatpush2.msra.mxu0 0.0
    %299 = vmatprep.subr.mxu0 0.0
    %300 = vmatpush2.msra.mxu0 0.0
    %301 = vmatprep.subr.mxu0 0.0
    %302 = vmatpush2.msra.mxu0 0.0
    %303 = vmatprep.subr.mxu0 0.0
    %304 = vmatpush2.msra.mxu0 0.0
    %305 = vmatprep.subr.mxu0 0.0
    %306 = vmatpush2.msra.mxu0 0.0
    %307 = vmatprep.subr.mxu0 0.0
    %308 = vmatpush2.msra.mxu0 0.0
    %309 = vmatprep.subr.mxu0 0.0
    %310 = vmatpush2.msra.mxu0 0.0
    %311 = vmatprep.mubr.f32.mxu0 0.0
    %312 = vmatmul.mubr.f32.gmra.mxu0 %v236
    %v313 = vpop.f32.mrf.mxu0
    %v314 = vadd.f32 %v217, %v313
    %v315 = vpop.f32.mrf.mxu0
    %316 = vmatprep.mubr.f32.mxu0 0.0
    %317 = vmatmul.mubr.f32.gmra.mxu0 %v239
    %v318 = vpop.f32.mrf.mxu0
    %v319 = vadd.f32 %v222, %v318
    %v320 = vpop.f32.mrf.mxu0
    %321 = vmatprep.mubr.f32.mxu0 0.0
    %322 = vmatmul.mubr.f32.gmra.mxu0 %v242
    %v323 = vpop.f32.mrf.mxu0
    %v324 = vadd.f32 %v227, %v323
    %v325 = vpop.f32.mrf.mxu0
    %326 = vmatprep.mubr.f32.mxu0 0.0
    %327 = vmatmul.mubr.f32.gmra.mxu0 %v245
    %v328 = vpop.f32.mrf.mxu0
    %v329 = vadd.f32 %v232, %v328
    %v330 = vpop.f32.mrf.mxu0
    %331 = vdwg.mxu0
    %332 = vst [vmem:[#allocation2] sm:$0xff] %v314
    %333 = vst [vmem:[#allocation2 + $0x8] sm:$0xff] %v319
    %334 = vst [vmem:[#allocation2 + $0x10] sm:$0xff] %v324
    %335 = vst [vmem:[#allocation2 + $0x18] sm:$0xff] %v329
    // Predicated region
    $region26: #{tpu_custom_call.1} parent=1 // pred_check
      _
    $region27: #{tpu_custom_call.1} parent=1 // pred_check_branch
      %337 = sbr.rel (0) target = $region29
    $region28: #{tpu_custom_call.1} parent=1 // pred_region
      %s339 = ssub.s32 512, 512
      %340 = vsyncadd [#allocation3], %s339
      %s341 = sshll.u32 [#allocation2], 4
      %s342 = int_to_ptr.vmem [resolvable:$true] %s341
      %347 = dma.vmem_to_hbm [thread:$0]  %s342, 512, %s6, [#allocation3], 128, 128, 8
    $region29: #{tpu_custom_call.1} parent=1 // pred_fallthru
      _
    // Predicated region
    $region30: #{tpu_custom_call.1} parent=1 // pred_check
      _
    $region31: #{tpu_custom_call.1} parent=1 // pred_check_branch
      %349 = sbr.rel (0) target = $region33
    $region32: #{tpu_custom_call.1} parent=1 // pred_region
      %350 = dma.done [#allocation3], 512
    $region33: #{tpu_custom_call.1} parent=1 // pred_fallthru
      _
    %351 = vsyncpa [#allocation3], 1

</llo_original>
